<compile_context>
chip_gen: v5e
topology: v5e:2x2
jax: 0.10.0
libtpu: 0.0.40
codegen_flags: <defaults>
</compile_context>

<pallas_src>
import math

import jax
import jax.numpy as jnp
from jax.experimental import pallas as pl
from jax.experimental.pallas import tpu as pltpu


def _cdiv(a, b):
    return -(-a // b)


def _round_up(a, b):
    return _cdiv(a, b) * b


def make_kgcn_kernel(n_iter, n_neighbor, dim, agg_type, tb):
    """Builds the batch-blocked KGCN kernel (all shape params static)."""
    N = n_neighbor
    # S[i] = number of "self" entities at iteration i = sum_{h<n_iter-i} N**h
    S = [sum(N ** h for h in range(n_iter - i)) for i in range(n_iter)]
    S0 = S[0]

    def kernel(user_ref, ev_ref, nv_ref, rv_ref, w_ref, b_ref, out_ref):
        user = user_ref[...]                       # [TB, D]
        Wt = w_ref[...]                            # [in_dim, D] (torch W transposed)
        bias = b_ref[...]                          # [1, D]
        if agg_type == 'concat':
            Wt_self = Wt[:dim]                     # static, sublane-aligned slices
            Wt_agg = Wt[dim:]

        # ---- user-relation attention, computed once per block ----
        user_b = user[None, None, :, :]            # [1, 1, TB, D] (hoisted broadcast)
        rv4 = rv_ref[...].reshape(S0, N, tb, dim)  # leading-dim split (free)
        scores = jnp.sum(rv4 * user_b, axis=-1, keepdims=True)      # [S0, N, TB, 1]
        scores = scores - jnp.max(scores, axis=1, keepdims=True)
        p = jnp.exp(scores)
        denom = jnp.sum(p, axis=1, keepdims=True)
        p = p * pl.reciprocal(denom, approx=True)                   # [S0, N, TB, 1]

        # ---- iterative aggregation ----
        cur = ev_ref[...]                                           # [S0, TB, D]
        neigh = nv_ref[...].reshape(S0, N, tb, dim)                 # iter-0 neighbors

        for i in range(n_iter):
            si = S[i]
            if i > 0:
                # neighbors of hop h are the previous iteration's hop h+1 rows;
                # packed contiguously -> free leading-axis slice + split.
                neigh = cur[1:].reshape(si, N, tb, dim)
            self_v = cur[:si]                                       # [si, TB, D]
            agg = jnp.sum(p[:si] * neigh, axis=1)                   # [si, TB, D]

            flat_agg = agg.reshape(si * tb, dim)
            if agg_type == 'sum':
                flat_self = self_v.reshape(si * tb, dim)
                lin = jnp.dot(flat_self + flat_agg, Wt,
                              preferred_element_type=jnp.float32)
            elif agg_type == 'neighbor':
                lin = jnp.dot(flat_agg, Wt,
                              preferred_element_type=jnp.float32)
            else:  # 'concat' -> split-weight form, no lane-axis concatenation
                flat_self = self_v.reshape(si * tb, dim)
                lin = (jnp.dot(flat_self, Wt_self,
                               preferred_element_type=jnp.float32)
                       + jnp.dot(flat_agg, Wt_agg,
                                 preferred_element_type=jnp.float32))
            lin = lin + bias
            if i == n_iter - 1:
                act_out = jnp.tanh(lin)
            else:
                act_out = jax.nn.sigmoid(lin)
            cur = act_out.reshape(si, tb, dim)

        item = cur[0]                                               # [TB, D]
        score = jnp.sum(user * item, axis=-1)                       # [TB]
        out_ref[...] = jax.nn.sigmoid(score)[None, :]               # lane-dense (1, TB)

    return kernel


def kgcn_forward(u, v, params, adj_ent, adj_rel, *, n_iter, n_neighbor, dim,
                 agg_type='sum', block_b=256,
                 vmem_budget_bytes=8 * 1024 * 1024):
    usr_emb, ent_emb, rel_emb, W, b = params
    N = n_neighbor
    B = u.shape[0]
    S0 = sum(N ** h for h in range(n_iter))
    T = N * S0
    in_dim = 2 * dim if agg_type == 'concat' else dim

    # Batch-block size: keep double-buffered input tiles under the VMEM budget
    # (v7x has only 64 MiB VMEM; v5e scoped default is 16 MiB).
    bytes_per_sample = (S0 + 2 * T + 1) * dim * 4
    tb_cap = max(8, (vmem_budget_bytes // (2 * bytes_per_sample)) // 8 * 8)
    tb = min(block_b, tb_cap)
    if B <= tb:
        tb = _round_up(B, 8)
    b_pad = _round_up(B, tb)

    # Pad indices (index 0 is always valid); padded rows are sliced off below.
    u_pad = jnp.pad(u, (0, b_pad - B))
    v_pad = jnp.pad(v, (0, b_pad - B))

    user_emb = usr_emb[u_pad]                                        # [Bp, D]

    # Adjacency expansion (same semantics as the torch _get_neighbors)
    entities = [v_pad.reshape(b_pad, 1)]
    relations = []
    for h in range(n_iter):
        e = adj_ent[entities[h]].reshape(b_pad, -1)                  # [Bp, N^{h+1}]
        r = adj_rel[entities[h]].reshape(b_pad, -1)
        entities.append(e)
        relations.append(r)

    # Pack per-hop indices: self entities (hops 0..n_iter-1), neighbor entities
    # (hops 1..n_iter) and relations; gather batch-minor so the kernel sees
    # [rows, TB, D] tiles and hop slicing stays on the leading axis.
    self_idx = jnp.concatenate([entities[h] for h in range(n_iter)], axis=1)     # [Bp, S0]
    nbr_idx = jnp.concatenate([entities[h + 1] for h in range(n_iter)], axis=1)  # [Bp, T]
    rel_idx = jnp.concatenate(relations, axis=1)                                 # [Bp, T]

    ev = ent_emb[self_idx.T]          # [S0, Bp, D]
    nv = ent_emb[nbr_idx.T]           # [T,  Bp, D]
    rv = rel_emb[rel_idx.T]           # [T,  Bp, D]
    Wt = jnp.transpose(W)             # [in_dim, D]
    bias2d = b.reshape(1, dim)

    kernel = make_kgcn_kernel(n_iter, n_neighbor, dim, agg_type, tb)

    out = pl.pallas_call(
        kernel,
        out_shape=jax.ShapeDtypeStruct((1, b_pad), jnp.float32),
        grid=(b_pad // tb,),
        in_specs=[
            pl.BlockSpec((tb, dim), lambda bb: (bb, 0)),             # user
            pl.BlockSpec((S0, tb, dim), lambda bb: (0, bb, 0)),      # ev (packed hops)
            pl.BlockSpec((T, tb, dim), lambda bb: (0, bb, 0)),       # nv (packed hops)
            pl.BlockSpec((T, tb, dim), lambda bb: (0, bb, 0)),       # rv (packed hops)
            pl.BlockSpec((in_dim, dim), lambda bb: (0, 0)),          # Wt
            pl.BlockSpec((1, dim), lambda bb: (0, 0)),               # bias
        ],
        out_specs=pl.BlockSpec((1, tb), lambda bb: (0, bb)),
        compiler_params=pltpu.CompilerParams(
            dimension_semantics=("parallel",),
            vmem_limit_bytes=32 * 1024 * 1024,
        ),
    )(user_emb, ev, nv, rv, Wt, bias2d)
    return out.reshape(b_pad)[:B]


def kgcn_reference(u, v, params, adj_ent, adj_rel, *, n_iter, n_neighbor, dim,
                   agg_type='sum'):
    """Pure-JAX reference replicating the PyTorch forward semantics."""
    usr_emb, ent_emb, rel_emb, W, b = params
    B = u.shape[0]
    user_emb = usr_emb[u]                                            # [B, D]

    entities = [v.reshape(B, 1)]
    relations = []
    for h in range(n_iter):
        e = adj_ent[entities[h]].reshape(B, -1)
        r = adj_rel[entities[h]].reshape(B, -1)
        entities.append(e)
        relations.append(r)

    entity_vectors = [ent_emb[e] for e in entities]                  # n_iter+1 tensors
    relation_vectors = [rel_emb[r] for r in relations]
    Wt = W.T

    def aggregate(self_v, neigh, rel, act):
        scores = jnp.sum(user_emb[:, None, None, :] * rel, axis=-1)  # [B, m, n]
        p = jax.nn.softmax(scores, axis=-1)
        agg = jnp.sum(p[..., None] * neigh, axis=2)                  # [B, m, D]
        if agg_type == 'sum':
            inp = self_v + agg
        elif agg_type == 'neighbor':
            inp = agg
        else:
            inp = jnp.concatenate([self_v, agg], axis=-1)
        lin = jnp.einsum('bmk,kd->bmd', inp, Wt,
                         precision=jax.lax.Precision.HIGHEST) + b
        return act(lin)

    for i in range(n_iter):
        act = jnp.tanh if i == n_iter - 1 else jax.nn.sigmoid
        nxt = []
        for hop in range(n_iter - i):
            neigh = entity_vectors[hop + 1].reshape(B, -1, n_neighbor, dim)
            rel = relation_vectors[hop].reshape(B, -1, n_neighbor, dim)
            nxt.append(aggregate(entity_vectors[hop], neigh, rel, act))
        entity_vectors = nxt

    item = entity_vectors[0].reshape(B, dim)
    return jax.nn.sigmoid(jnp.sum(user_emb * item, axis=1))


if __name__ == "__main__":
    dim, n_neighbor, n_iter = 32, 4, 2
    num_user, num_ent, num_rel = 16, 32, 8

    key = jax.random.PRNGKey(0)
    ks = jax.random.split(key, 16)

    usr_emb = 0.1 * jax.random.normal(ks[0], (num_user, dim), jnp.float32)
    ent_emb = 0.1 * jax.random.normal(ks[1], (num_ent, dim), jnp.float32)
    rel_emb = 0.1 * jax.random.normal(ks[2], (num_rel, dim), jnp.float32)
    # deterministic stand-in for the randomly sampled KG adjacency
    adj_ent = jax.random.randint(ks[3], (num_ent, n_neighbor), 0, num_ent,
                                 dtype=jnp.int32)
    adj_rel = jax.random.randint(ks[4], (num_ent, n_neighbor), 0, num_rel,
                                 dtype=jnp.int32)

    def make_linear(k, agg_type):
        in_dim = 2 * dim if agg_type == 'concat' else dim
        kw, kb = jax.random.split(k)
        W = (1.0 / math.sqrt(in_dim)) * jax.random.normal(
            kw, (dim, in_dim), jnp.float32)       # torch Linear weight [out, in]
        b = 0.01 * jax.random.normal(kb, (dim,), jnp.float32)
        return W, b

    # (batch, aggregator): small single-block, concat path, multi-block padded batch
    cases = [(8, 'sum'), (8, 'concat'), (300, 'sum')]
    for idx, (B, agg_type) in enumerate(cases):
        ku, kv = jax.random.split(ks[5 + idx])
        u = jax.random.randint(ku, (B,), 0, num_user, dtype=jnp.int32)
        v = jax.random.randint(kv, (B,), 0, num_ent, dtype=jnp.int32)
        W, b = make_linear(ks[10 + idx], agg_type)
        params = (usr_emb, ent_emb, rel_emb, W, b)

        out = kgcn_forward(u, v, params, adj_ent, adj_rel,
                           n_iter=n_iter, n_neighbor=n_neighbor, dim=dim,
                           agg_type=agg_type)
        out = jax.block_until_ready(out)

        ref = kgcn_reference(u, v, params, adj_ent, adj_rel,
                             n_iter=n_iter, n_neighbor=n_neighbor, dim=dim,
                             agg_type=agg_type)
        ref = jax.block_until_ready(ref)

        assert out.shape == (B,) and out.dtype == jnp.float32
        # tolerance loosened slightly: kernel uses approximate reciprocal (EUP)
        # for the softmax normalization.
        assert jnp.allclose(out, ref, atol=1e-3, rtol=1e-3), (
            agg_type, B, float(jnp.max(jnp.abs(out - ref))))

    print("KERNEL_OK")
</pallas_src>

<mosaic_0001>
module attributes {stable_mosaic.version = 11 : i64} {
  func.func @kernel(%arg0: i32, %arg1: memref<8x32xf32, #tpu.memory_space<vmem>>, %arg2: memref<5x8x32xf32, #tpu.memory_space<vmem>>, %arg3: memref<20x8x32xf32, #tpu.memory_space<vmem>>, %arg4: memref<20x8x32xf32, #tpu.memory_space<vmem>>, %arg5: memref<32x32xf32, #tpu.memory_space<vmem>>, %arg6: memref<1x32xf32, #tpu.memory_space<vmem>>, %arg7: memref<1x8xf32, #tpu.memory_space<vmem>>) attributes {dimension_semantics = [#tpu.dimension_semantics<parallel>], iteration_bounds = array<i64: 1>, scalar_prefetch = 0 : i64, scratch_operands = 0 : i64, tpu.core_type = #tpu.core_type<tc>, window_params = [{transform_indices = @transform_0, window_bounds = array<i64: 8, 32>}, {transform_indices = @transform_1, window_bounds = array<i64: 5, 8, 32>}, {transform_indices = @transform_2, window_bounds = array<i64: 20, 8, 32>}, {transform_indices = @transform_3, window_bounds = array<i64: 20, 8, 32>}, {pipeline_mode = #tpu.pipeline_mode<synchronous>, transform_indices = @transform_4, window_bounds = array<i64: 32, 32>}, {pipeline_mode = #tpu.pipeline_mode<synchronous>, transform_indices = @transform_5, window_bounds = array<i64: 1, 32>}, {transform_indices = @transform_6, window_bounds = array<i64: 1, 8>}]} {
    %c0 = arith.constant 0 : index
    %c0_0 = arith.constant 0 : index
    %0 = vector.load %arg1[%c0, %c0_0] : memref<8x32xf32, #tpu.memory_space<vmem>>, vector<8x32xf32>
    %c0_1 = arith.constant 0 : index
    %c0_2 = arith.constant 0 : index
    %1 = vector.load %arg5[%c0_1, %c0_2] : memref<32x32xf32, #tpu.memory_space<vmem>>, vector<32x32xf32>
    %c0_3 = arith.constant 0 : index
    %c0_4 = arith.constant 0 : index
    %2 = vector.load %arg6[%c0_3, %c0_4] : memref<1x32xf32, #tpu.memory_space<vmem>>, vector<1x32xf32>
    %3 = vector.shape_cast %0 : vector<8x32xf32> to vector<1x1x8x32xf32>
    %c0_5 = arith.constant 0 : index
    %c0_6 = arith.constant 0 : index
    %c0_7 = arith.constant 0 : index
    %4 = vector.load %arg4[%c0_5, %c0_6, %c0_7] : memref<20x8x32xf32, #tpu.memory_space<vmem>>, vector<20x8x32xf32>
    %5 = vector.shape_cast %4 : vector<20x8x32xf32> to vector<5x4x8x32xf32>
    %6 = vector.broadcast %3 : vector<1x1x8x32xf32> to vector<5x4x8x32xf32>
    %7 = arith.mulf %5, %6 : vector<5x4x8x32xf32>
    %cst = arith.constant dense<0.000000e+00> : vector<5x4x8xf32>
    %8 = vector.multi_reduction <add>, %7, %cst [3] : vector<5x4x8x32xf32> to vector<5x4x8xf32>
    %9 = vector.shape_cast %8 : vector<5x4x8xf32> to vector<5x4x8x1xf32>
    %cst_8 = arith.constant dense<0xFF800000> : vector<5x8x1xf32>
    %10 = vector.multi_reduction <maximumf>, %9, %cst_8 [1] : vector<5x4x8x1xf32> to vector<5x8x1xf32>
    %11 = vector.shape_cast %10 : vector<5x8x1xf32> to vector<5x1x8x1xf32>
    %12 = vector.broadcast %11 : vector<5x1x8x1xf32> to vector<5x4x8x1xf32>
    %13 = arith.subf %9, %12 : vector<5x4x8x1xf32>
    %14 = math.exp %13 : vector<5x4x8x1xf32>
    %cst_9 = arith.constant dense<0.000000e+00> : vector<5x8x1xf32>
    %15 = vector.multi_reduction <add>, %14, %cst_9 [1] : vector<5x4x8x1xf32> to vector<5x8x1xf32>
    %16 = vector.shape_cast %15 : vector<5x8x1xf32> to vector<5x1x8x1xf32>
    %17 = tpu.reciprocal %16 {approx = true} : vector<5x1x8x1xf32> -> vector<5x1x8x1xf32>
    %18 = vector.broadcast %17 : vector<5x1x8x1xf32> to vector<5x4x8x1xf32>
    %19 = arith.mulf %14, %18 : vector<5x4x8x1xf32>
    %c0_10 = arith.constant 0 : index
    %c0_11 = arith.constant 0 : index
    %c0_12 = arith.constant 0 : index
    %20 = vector.load %arg2[%c0_10, %c0_11, %c0_12] : memref<5x8x32xf32, #tpu.memory_space<vmem>>, vector<5x8x32xf32>
    %c0_13 = arith.constant 0 : index
    %c0_14 = arith.constant 0 : index
    %c0_15 = arith.constant 0 : index
    %21 = vector.load %arg3[%c0_13, %c0_14, %c0_15] : memref<20x8x32xf32, #tpu.memory_space<vmem>>, vector<20x8x32xf32>
    %22 = vector.shape_cast %21 : vector<20x8x32xf32> to vector<5x4x8x32xf32>
    %23 = vector.broadcast %19 : vector<5x4x8x1xf32> to vector<5x4x8x32xf32>
    %24 = arith.mulf %23, %22 : vector<5x4x8x32xf32>
    %cst_16 = arith.constant dense<0.000000e+00> : vector<5x8x32xf32>
    %25 = vector.multi_reduction <add>, %24, %cst_16 [1] : vector<5x4x8x32xf32> to vector<5x8x32xf32>
    %26 = vector.shape_cast %25 : vector<5x8x32xf32> to vector<40x32xf32>
    %27 = vector.shape_cast %20 : vector<5x8x32xf32> to vector<40x32xf32>
    %28 = arith.addf %27, %26 : vector<40x32xf32>
    %cst_17 = arith.constant dense<0.000000e+00> : vector<40x32xf32>
    %29 = tpu.matmul %28, %1, %cst_17 {dimension_numbers = #tpu.dot_dimension_numbers<[1], [0], [0], [1], [0, 0, 1, 1], [], []>} : vector<40x32xf32>, vector<32x32xf32>, vector<40x32xf32> -> vector<40x32xf32>
    %30 = vector.broadcast %2 : vector<1x32xf32> to vector<40x32xf32>
    %31 = arith.addf %29, %30 : vector<40x32xf32>
    %32 = arith.negf %31 : vector<40x32xf32>
    %33 = math.exp %32 : vector<40x32xf32>
    %cst_18 = arith.constant 1.000000e+00 : f32
    %34 = vector.broadcast %cst_18 : f32 to vector<40x32xf32>
    %35 = arith.addf %34, %33 : vector<40x32xf32>
    %36 = arith.divf %34, %35 : vector<40x32xf32>
    %37 = vector.shape_cast %36 : vector<40x32xf32> to vector<5x8x32xf32>
    %38 = vector.extract_strided_slice %37 {offsets = [1, 0, 0], sizes = [4, 8, 32], strides = [1, 1, 1]} : vector<5x8x32xf32> to vector<4x8x32xf32>
    %39 = vector.shape_cast %38 : vector<4x8x32xf32> to vector<1x4x8x32xf32>
    %40 = vector.extract_strided_slice %37 {offsets = [0, 0, 0], sizes = [1, 8, 32], strides = [1, 1, 1]} : vector<5x8x32xf32> to vector<1x8x32xf32>
    %41 = vector.extract_strided_slice %19 {offsets = [0, 0, 0, 0], sizes = [1, 4, 8, 1], strides = [1, 1, 1, 1]} : vector<5x4x8x1xf32> to vector<1x4x8x1xf32>
    %42 = vector.broadcast %41 : vector<1x4x8x1xf32> to vector<1x4x8x32xf32>
    %43 = arith.mulf %42, %39 : vector<1x4x8x32xf32>
    %cst_19 = arith.constant dense<0.000000e+00> : vector<1x8x32xf32>
    %44 = vector.multi_reduction <add>, %43, %cst_19 [1] : vector<1x4x8x32xf32> to vector<1x8x32xf32>
    %45 = vector.shape_cast %44 : vector<1x8x32xf32> to vector<8x32xf32>
    %46 = vector.shape_cast %40 : vector<1x8x32xf32> to vector<8x32xf32>
    %47 = arith.addf %46, %45 : vector<8x32xf32>
    %cst_20 = arith.constant dense<0.000000e+00> : vector<8x32xf32>
    %48 = tpu.matmul %47, %1, %cst_20 {dimension_numbers = #tpu.dot_dimension_numbers<[1], [0], [0], [1], [0, 0, 1, 1], [], []>} : vector<8x32xf32>, vector<32x32xf32>, vector<8x32xf32> -> vector<8x32xf32>
    %49 = vector.broadcast %2 : vector<1x32xf32> to vector<8x32xf32>
    %50 = arith.addf %48, %49 : vector<8x32xf32>
    %51 = math.tanh %50 : vector<8x32xf32>
    %52 = vector.shape_cast %51 : vector<8x32xf32> to vector<1x8x32xf32>
    %53 = vector.shape_cast %52 : vector<1x8x32xf32> to vector<8x32xf32>
    %54 = arith.mulf %0, %53 : vector<8x32xf32>
    %cst_21 = arith.constant dense<0.000000e+00> : vector<8xf32>
    %55 = vector.multi_reduction <add>, %54, %cst_21 [1] : vector<8x32xf32> to vector<8xf32>
    %56 = arith.negf %55 : vector<8xf32>
    %57 = math.exp %56 : vector<8xf32>
    %cst_22 = arith.constant 1.000000e+00 : f32
    %58 = vector.broadcast %cst_22 : f32 to vector<8xf32>
    %59 = arith.addf %58, %57 : vector<8xf32>
    %60 = arith.divf %58, %59 : vector<8xf32>
    %61 = vector.shape_cast %60 : vector<8xf32> to vector<1x8xf32>
    %c0_23 = arith.constant 0 : index
    %c0_24 = arith.constant 0 : index
    %62 = vector.load %arg7[%c0_23, %c0_24] : memref<1x8xf32, #tpu.memory_space<vmem>>, vector<1x8xf32>
    tpu.vector_store %arg7[%c0_23, %c0_24], %61 {strides = array<i32>} : memref<1x8xf32, #tpu.memory_space<vmem>>, vector<1x8xf32>,
    return
  }
  func.func @transform_0(%arg0: i32) -> (i32, i32) {
    %c0_i32 = arith.constant 0 : i32
    %c0_i32_0 = arith.constant 0 : i32
    return %arg0, %c0_i32 : i32, i32
  }
  func.func @transform_1(%arg0: i32) -> (i32, i32, i32) {
    %c0_i32 = arith.constant 0 : i32
    %c0_i32_0 = arith.constant 0 : i32
    %c0_i32_1 = arith.constant 0 : i32
    return %c0_i32, %arg0, %c0_i32_0 : i32, i32, i32
  }
  func.func @transform_2(%arg0: i32) -> (i32, i32, i32) {
    %c0_i32 = arith.constant 0 : i32
    %c0_i32_0 = arith.constant 0 : i32
    %c0_i32_1 = arith.constant 0 : i32
    return %c0_i32, %arg0, %c0_i32_0 : i32, i32, i32
  }
  func.func @transform_3(%arg0: i32) -> (i32, i32, i32) {
    %c0_i32 = arith.constant 0 : i32
    %c0_i32_0 = arith.constant 0 : i32
    %c0_i32_1 = arith.constant 0 : i32
    return %c0_i32, %arg0, %c0_i32_0 : i32, i32, i32
  }
  func.func @transform_4(%arg0: i32) -> (i32, i32) {
    %c0_i32 = arith.constant 0 : i32
    %c0_i32_0 = arith.constant 0 : i32
    %c0_i32_1 = arith.constant 0 : i32
    return %c0_i32, %c0_i32_0 : i32, i32
  }
  func.func @transform_5(%arg0: i32) -> (i32, i32) {
    %c0_i32 = arith.constant 0 : i32
    %c0_i32_0 = arith.constant 0 : i32
    %c0_i32_1 = arith.constant 0 : i32
    return %c0_i32, %c0_i32_0 : i32, i32
  }
  func.func @transform_6(%arg0: i32) -> (i32, i32) {
    %c0_i32 = arith.constant 0 : i32
    %c0_i32_0 = arith.constant 0 : i32
    return %c0_i32, %arg0 : i32, i32
  }
}

</mosaic_0001>

<llo_original>
// kernel: tpu_custom_call.1
$region0: #{tpu_custom_call.1}
  #allocation0 [shape = 'u32[]', space=smem, size = 0x4, offset = 0x4, fixed_abs, tag = 'smem constant byte address 0x4 - core index']
  #allocation1 [shape = 'u32[72,128]{1,0:T(1,128)}', space=vmem, size = 0x9000, scoped, tag = 'internal scratch']
  %s0 = inlined_call_operand.hbm [shape: f32[8,32], index: 0, kind: input, shape index: {}]
  %s1 = inlined_call_operand.hbm [shape: f32[5,8,32], index: 1, kind: input, shape index: {}]
  %s2 = inlined_call_operand.hbm [shape: f32[20,8,32], index: 2, kind: input, shape index: {}]
  %s3 = inlined_call_operand.hbm [shape: f32[20,8,32], index: 3, kind: input, shape index: {}]
  %s4 = inlined_call_operand.hbm [shape: f32[32,32], index: 4, kind: input, shape index: {}]
  %s5 = inlined_call_operand.vmem [shape: f32[1,32], index: 5, kind: input, shape index: {}]
  %s6 = inlined_call_operand.hbm [shape: f32[1,8], index: 6, kind: output, shape index: {}]
  %s7 = sld [smem:[#allocation0]]
  $region54: #{tpu_custom_call.1} parent=0
    _
  %s9 = ssub.s32 1, %s7
  %s10 = scalar_select 0, %s9, %s7
  $region1: #{tpu_custom_call.1} parent=0
    #allocation2 [shape = 'u8[4096]{0}', space=vmem, size = 0x1000, scoped, tag = 'input window, operand 0, single buffered']
    #allocation3 [shape = 's32[1]{0}', space=sflag, size = 0x4, scoped, tag = 'scoped memory for tpu_custom_call.1']
    #allocation4 [shape = 's32[1]{0}', space=sflag, size = 0x4, scoped, tag = 'scoped memory for tpu_custom_call.1']
    #allocation5 [shape = 'u8[20480]{0}', space=vmem, size = 0x5000, scoped, tag = 'input window, operand 1, single buffered']
    #allocation6 [shape = 's32[1]{0}', space=sflag, size = 0x4, scoped, tag = 'scoped memory for tpu_custom_call.1']
    #allocation7 [shape = 'u8[81920]{0}', space=vmem, size = 0x14000, scoped, tag = 'input window, operand 2, single buffered']
    #allocation8 [shape = 'u8[81920]{0}', space=vmem, size = 0x14000, scoped, tag = 'input window, operand 3, single buffered']
    #allocation9 [shape = 's32[1]{0}', space=sflag, size = 0x4, scoped, tag = 'scoped memory for tpu_custom_call.1']
    #allocation10 [shape = 'u8[16384]{0}', space=vmem, size = 0x4000, scoped, tag = 'input window, operand 4, single buffered']
    #allocation11 [shape = 'u8[512]{0}', space=vmem, size = 0x400, scoped, tag = 'output window, operand 0, single buffered']
    %11 = vsyncpa [#allocation3], 0
    %12 = vsyncpa [#allocation6], 0
    %13 = vsyncpa [#allocation9], 0
    %14 = vsyncpa [#allocation4], 0
    // Predicated region
    $region2: #{tpu_custom_call.1} parent=1 // pred_check
      _
    $region3: #{tpu_custom_call.1} parent=1 // pred_check_branch
      %16 = sbr.rel (0) target = $region5
    $region4: #{tpu_custom_call.1} parent=1 // pred_region
      %18 = vsyncadd [#allocation3], 0
      %s20 = sshll.u32 %s0, 4
      %s21 = int_to_ptr.hbm [resolvable:$true] %s20
      %s22 = sshll.u32 [#allocation2], 4
      %s23 = int_to_ptr.vmem [resolvable:$true] %s22
      %25 = dma.hbm_to_vmem [thread:$0]  %s21, 128, %s23, [#allocation3]
    $region5: #{tpu_custom_call.1} parent=1 // pred_fallthru
      _
    // Predicated region
    $region6: #{tpu_custom_call.1} parent=1 // pred_check
      _
    $region7: #{tpu_custom_call.1} parent=1 // pred_check_branch
      %27 = sbr.rel (0) target = $region9
    $region8: #{tpu_custom_call.1} parent=1 // pred_region
      %29 = vsyncadd [#allocation6], 0
      %s30 = sshll.u32 %s1, 4
      %s31 = int_to_ptr.hbm [resolvable:$true] %s30
      %s32 = sshll.u32 [#allocation5], 4
      %s33 = int_to_ptr.vmem [resolvable:$true] %s32
      %38 = dma.hbm_to_vmem [thread:$0]  %s31, 640, %s33, [#allocation6], 128, 128, 8
    $region9: #{tpu_custom_call.1} parent=1 // pred_fallthru
      _
    // Predicated region
    $region10: #{tpu_custom_call.1} parent=1 // pred_check
      _
    $region11: #{tpu_custom_call.1} parent=1 // pred_check_branch
      %40 = sbr.rel (0) target = $region13
    $region12: #{tpu_custom_call.1} parent=1 // pred_region
      %42 = vsyncadd [#allocation6], 0
      %s43 = sshll.u32 %s2, 4
      %s44 = int_to_ptr.hbm [resolvable:$true] %s43
      %s45 = sshll.u32 [#allocation7], 4
      %s46 = int_to_ptr.vmem [resolvable:$true] %s45
      %51 = dma.hbm_to_vmem [thread:$0]  %s44, 2560, %s46, [#allocation6], 128, 128, 8
    $region13: #{tpu_custom_call.1} parent=1 // pred_fallthru
      _
    // Predicated region
    $region14: #{tpu_custom_call.1} parent=1 // pred_check
      _
    $region15: #{tpu_custom_call.1} parent=1 // pred_check_branch
      %53 = sbr.rel (0) target = $region17
    $region16: #{tpu_custom_call.1} parent=1 // pred_region
      %55 = vsyncadd [#allocation9], 0
      %s56 = sshll.u32 %s3, 4
      %s57 = int_to_ptr.hbm [resolvable:$true] %s56
      %s58 = sshll.u32 [#allocation8], 4
      %s59 = int_to_ptr.vmem [resolvable:$true] %s58
      %64 = dma.hbm_to_vmem [thread:$0]  %s57, 2560, %s59, [#allocation9], 128, 128, 8
    $region17: #{tpu_custom_call.1} parent=1 // pred_fallthru
      _
    // Predicated region
    $region18: #{tpu_custom_call.1} parent=1 // pred_check
      _
    $region19: #{tpu_custom_call.1} parent=1 // pred_check_branch
      %66 = sbr.rel (0) target = $region21
    $region20: #{tpu_custom_call.1} parent=1 // pred_region
      %68 = vsyncadd [#allocation9], 0
      %s69 = sshll.u32 %s4, 4
      %s70 = int_to_ptr.hbm [resolvable:$true] %s69
      %s71 = sshll.u32 [#allocation10], 4
      %s72 = int_to_ptr.vmem [resolvable:$true] %s71
      %77 = dma.hbm_to_vmem [thread:$0]  %s70, 512, %s72, [#allocation9], 128, 128, 8
    $region21: #{tpu_custom_call.1} parent=1 // pred_fallthru
      _
    // Predicated region
    $region22: #{tpu_custom_call.1} parent=1 // pred_check
      _
    $region23: #{tpu_custom_call.1} parent=1 // pred_check_branch
      %79 = sbr.rel (0) target = $region25
    $region24: #{tpu_custom_call.1} parent=1 // pred_region
      _
    $region25: #{tpu_custom_call.1} parent=1 // pred_fallthru
      _
    // Predicated region
    $region26: #{tpu_custom_call.1} parent=1 // pred_check
      _
    $region27: #{tpu_custom_call.1} parent=1 // pred_check_branch
      %81 = sbr.rel (0) target = $region29
    $region28: #{tpu_custom_call.1} parent=1 // pred_region
      %83 = dma.done [#allocation3], 128
    $region29: #{tpu_custom_call.1} parent=1 // pred_fallthru
      _
    // Predicated region
    $region30: #{tpu_custom_call.1} parent=1 // pred_check
      _
    $region31: #{tpu_custom_call.1} parent=1 // pred_check_branch
      %85 = sbr.rel (0) target = $region33
    $region32: #{tpu_custom_call.1} parent=1 // pred_region
      %87 = dma.done [#allocation6], 640
    $region33: #{tpu_custom_call.1} parent=1 // pred_fallthru
      _
    // Predicated region
    $region34: #{tpu_custom_call.1} parent=1 // pred_check
      _
    $region35: #{tpu_custom_call.1} parent=1 // pred_check_branch
      %89 = sbr.rel (0) target = $region37
    $region36: #{tpu_custom_call.1} parent=1 // pred_region
      %91 = dma.done [#allocation6], 2560
    $region37: #{tpu_custom_call.1} parent=1 // pred_fallthru
      _
    // Predicated region
    $region38: #{tpu_custom_call.1} parent=1 // pred_check
      _
    $region39: #{tpu_custom_call.1} parent=1 // pred_check_branch
      %93 = sbr.rel (0) target = $region41
    $region40: #{tpu_custom_call.1} parent=1 // pred_region
      %95 = dma.done [#allocation9], 2560
    $region41: #{tpu_custom_call.1} parent=1 // pred_fallthru
      _
    // Predicated region
    $region42: #{tpu_custom_call.1} parent=1 // pred_check
      _
    $region43: #{tpu_custom_call.1} parent=1 // pred_check_branch
      %97 = sbr.rel (0) target = $region45
    $region44: #{tpu_custom_call.1} parent=1 // pred_region
      %99 = dma.done [#allocation9], 512
    $region45: #{tpu_custom_call.1} parent=1 // pred_fallthru
      _
    %v100 = vld [vmem:[#allocation2] sm:$0xff]
    %v101 = vld [vmem:[#allocation10] sm:$0xff]
    %v102 = vld [vmem:[#allocation10 + $0x8] sm:$0xff]
    %v103 = vld [vmem:[#allocation10 + $0x10] sm:$0xff]
    %v104 = vld [vmem:[#allocation10 + $0x18] sm:$0xff]
    %v105 = vld [vmem:[%s5] sm:$0x1]
    %v106 = vld [vmem:[#allocation8] sm:$0xff]
    %v107 = vld [vmem:[#allocation8 + $0x8] sm:$0xff]
    %v108 = vld [vmem:[#allocation8 + $0x10] sm:$0xff]
    %v109 = vld [vmem:[#allocation8 + $0x18] sm:$0xff]
    %v110 = vld [vmem:[#allocation8 + $0x20] sm:$0xff]
    %v111 = vld [vmem:[#allocation8 + $0x28] sm:$0xff]
    %v112 = vld [vmem:[#allocation8 + $0x30] sm:$0xff]
    %v113 = vld [vmem:[#allocation8 + $0x38] sm:$0xff]
    %v114 = vld [vmem:[#allocation8 + $0x40] sm:$0xff]
    %v115 = vld [vmem:[#allocation8 + $0x48] sm:$0xff]
    %v116 = vld [vmem:[#allocation8 + $0x50] sm:$0xff]
    %v117 = vld [vmem:[#allocation8 + $0x58] sm:$0xff]
    %v118 = vld [vmem:[#allocation8 + $0x60] sm:$0xff]
    %v119 = vld [vmem:[#allocation8 + $0x68] sm:$0xff]
    %v120 = vld [vmem:[#allocation8 + $0x70] sm:$0xff]
    %v121 = vld [vmem:[#allocation8 + $0x78] sm:$0xff]
    %v122 = vld [vmem:[#allocation8 + $0x80] sm:$0xff]
    %v123 = vld [vmem:[#allocation8 + $0x88] sm:$0xff]
    %v124 = vld [vmem:[#allocation8 + $0x90] sm:$0xff]
    %v125 = vld [vmem:[#allocation8 + $0x98] sm:$0xff]
    %v126 = vmul.f32 %v106, %v100
    %v127 = vmul.f32 %v107, %v100
    %v128 = vmul.f32 %v108, %v100
    %v129 = vmul.f32 %v109, %v100
    %v130 = vmul.f32 %v110, %v100
    %v131 = vmul.f32 %v111, %v100
    %v132 = vmul.f32 %v112, %v100
    %v133 = vmul.f32 %v113, %v100
    %v134 = vmul.f32 %v114, %v100
    %v135 = vmul.f32 %v115, %v100
    %v136 = vmul.f32 %v116, %v100
    %v137 = vmul.f32 %v117, %v100
    %v138 = vmul.f32 %v118, %v100
    %v139 = vmul.f32 %v119, %v100
    %v140 = vmul.f32 %v120, %v100
    %v141 = vmul.f32 %v121, %v100
    %v142 = vmul.f32 %v122, %v100
    %v143 = vmul.f32 %v123, %v100
    %v144 = vmul.f32 %v124, %v100
    %v145 = vmul.f32 %v125, %v100
    %vm146 = vcmask 261120
    %v147 = vsel %vm146, %v126, 0.0
    %148 = vadd.xlane.f32.xlu0 %v147
    %v149 = vpop.xlane.xlu0 %148
    %v150 = vsel %vm146, %v127, 0.0
    %151 = vadd.xlane.f32.xlu0 %v150
    %v152 = vpop.xlane.xlu0 %151
    %v153 = vsel %vm146, %v128, 0.0
    %154 = vadd.xlane.f32.xlu0 %v153
    %v155 = vpop.xlane.xlu0 %154
    %v156 = vsel %vm146, %v129, 0.0
    %157 = vadd.xlane.f32.xlu0 %v156
    %v158 = vpop.xlane.xlu0 %157
    %v159 = vsel %vm146, %v130, 0.0
    %160 = vadd.xlane.f32.xlu0 %v159
    %v161 = vpop.xlane.xlu0 %160
    %v162 = vsel %vm146, %v131, 0.0
    %163 = vadd.xlane.f32.xlu0 %v162
    %v164 = vpop.xlane.xlu0 %163
    %v165 = vsel %vm146, %v132, 0.0
    %166 = vadd.xlane.f32.xlu0 %v165
    %v167 = vpop.xlane.xlu0 %166
    %v168 = vsel %vm146, %v133, 0.0
    %169 = vadd.xlane.f32.xlu0 %v168
    %v170 = vpop.xlane.xlu0 %169
    %v171 = vsel %vm146, %v134, 0.0
    %172 = vadd.xlane.f32.xlu0 %v171
    %v173 = vpop.xlane.xlu0 %172
    %v174 = vsel %vm146, %v135, 0.0
    %175 = vadd.xlane.f32.xlu0 %v174
    %v176 = vpop.xlane.xlu0 %175
    %v177 = vsel %vm146, %v136, 0.0
    %178 = vadd.xlane.f32.xlu0 %v177
    %v179 = vpop.xlane.xlu0 %178
    %v180 = vsel %vm146, %v137, 0.0
    %181 = vadd.xlane.f32.xlu0 %v180
    %v182 = vpop.xlane.xlu0 %181
    %v183 = vsel %vm146, %v138, 0.0
    %184 = vadd.xlane.f32.xlu0 %v183
    %v185 = vpop.xlane.xlu0 %184
    %v186 = vsel %vm146, %v139, 0.0
    %187 = vadd.xlane.f32.xlu0 %v186
    %v188 = vpop.xlane.xlu0 %187
    %v189 = vsel %vm146, %v140, 0.0
    %190 = vadd.xlane.f32.xlu0 %v189
    %v191 = vpop.xlane.xlu0 %190
    %v192 = vsel %vm146, %v141, 0.0
    %193 = vadd.xlane.f32.xlu0 %v192
    %v194 = vpop.xlane.xlu0 %193
    %v195 = vsel %vm146, %v142, 0.0
    %196 = vadd.xlane.f32.xlu0 %v195
    %v197 = vpop.xlane.xlu0 %196
    %v198 = vsel %vm146, %v143, 0.0
    %199 = vadd.xlane.f32.xlu0 %v198
    %v200 = vpop.xlane.xlu0 %199
    %v201 = vsel %vm146, %v144, 0.0
    %202 = vadd.xlane.f32.xlu0 %v201
    %v203 = vpop.xlane.xlu0 %202
    %v204 = vsel %vm146, %v145, 0.0
    %205 = vadd.xlane.f32.xlu0 %v204
    %v206 = vpop.xlane.xlu0 %205
    %v207 = vmax.f32 %v149, %v152
    %v208 = vmax.f32 %v207, %v155
    %v209 = vmax.f32 %v208, %v158
    %v210 = vmax.f32 %v161, %v164
    %v211 = vmax.f32 %v210, %v167
    %v212 = vmax.f32 %v211, %v170
    %v213 = vmax.f32 %v173, %v176
    %v214 = vmax.f32 %v213, %v179
    %v215 = vmax.f32 %v214, %v182
    %v216 = vmax.f32 %v185, %v188
    %v217 = vmax.f32 %v216, %v191
    %v218 = vmax.f32 %v217, %v194
    %v219 = vmax.f32 %v197, %v200
    %v220 = vmax.f32 %v219, %v203
    %v221 = vmax.f32 %v220, %v206
    %v222 = vsub.f32 %v149, %v209
    %v223 = vsub.f32 %v152, %v209
    %v224 = vsub.f32 %v155, %v209
    %v225 = vsub.f32 %v158, %v209
    %v226 = vsub.f32 %v161, %v212
    %v227 = vsub.f32 %v164, %v212
    %v228 = vsub.f32 %v167, %v212
    %v229 = vsub.f32 %v170, %v212
    %v230 = vsub.f32 %v173, %v215
    %v231 = vsub.f32 %v176, %v215
    %v232 = vsub.f32 %v179, %v215
    %v233 = vsub.f32 %v182, %v215
    %v234 = vsub.f32 %v185, %v218
    %v235 = vsub.f32 %v188, %v218
    %v236 = vsub.f32 %v191, %v218
    %v237 = vsub.f32 %v194, %v218
    %v238 = vsub.f32 %v197, %v221
    %v239 = vsub.f32 %v200, %v221
    %v240 = vsub.f32 %v203, %v221
    %v241 = vsub.f32 %v206, %v221
    %v242 = vmul.f32 %v222, 1.442695
    %v243 = vpow.pop %v242
    %v244 = vmul.f32 %v223, 1.442695
    %v245 = vpow.pop %v244
    %v246 = vmul.f32 %v224, 1.442695
    %v247 = vpow.pop %v246
    %v248 = vmul.f32 %v225, 1.442695
    %v249 = vpow.pop %v248
    %v250 = vmul.f32 %v226, 1.442695
    %v251 = vpow.pop %v250
    %v252 = vmul.f32 %v227, 1.442695
    %v253 = vpow.pop %v252
    %v254 = vmul.f32 %v228, 1.442695
    %v255 = vpow.pop %v254
    %v256 = vmul.f32 %v229, 1.442695
    %v257 = vpow.pop %v256
    %v258 = vmul.f32 %v230, 1.442695
    %v259 = vpow.pop %v258
    %v260 = vmul.f32 %v231, 1.442695
    %v261 = vpow.pop %v260
    %v262 = vmul.f32 %v232, 1.442695
    %v263 = vpow.pop %v262
    %v264 = vmul.f32 %v233, 1.442695
    %v265 = vpow.pop %v264
    %v266 = vmul.f32 %v234, 1.442695
    %v267 = vpow.pop %v266
    %v268 = vmul.f32 %v235, 1.442695
    %v269 = vpow.pop %v268
    %v270 = vmul.f32 %v236, 1.442695
    %v271 = vpow.pop %v270
    %v272 = vmul.f32 %v237, 1.442695
    %v273 = vpow.pop %v272
    %v274 = vmul.f32 %v238, 1.442695
    %v275 = vpow.pop %v274
    %v276 = vmul.f32 %v239, 1.442695
    %v277 = vpow.pop %v276
    %v278 = vmul.f32 %v240, 1.442695
    %v279 = vpow.pop %v278
    %v280 = vmul.f32 %v241, 1.442695
    %v281 = vpow.pop %v280
    %v282 = vadd.f32 %v243, %v245
    %v283 = vadd.f32 %v282, %v247
    %v284 = vadd.f32 %v283, %v249
    %v285 = vadd.f32 %v251, %v253
    %v286 = vadd.f32 %v285, %v255
    %v287 = vadd.f32 %v286, %v257
    %v288 = vadd.f32 %v259, %v261
    %v289 = vadd.f32 %v288, %v263
    %v290 = vadd.f32 %v289, %v265
    %v291 = vadd.f32 %v267, %v269
    %v292 = vadd.f32 %v291, %v271
    %v293 = vadd.f32 %v292, %v273
    %v294 = vadd.f32 %v275, %v277
    %v295 = vadd.f32 %v294, %v279
    %v296 = vadd.f32 %v295, %v281
    %v297 = vrcp.pop %v284
    %v298 = vrcp.pop %v287
    %v299 = vrcp.pop %v290
    %v300 = vrcp.pop %v293
    %v301 = vrcp.pop %v296
    %v302 = vmul.f32 %v243, %v297
    %v303 = vmul.f32 %v245, %v297
    %v304 = vmul.f32 %v247, %v297
    %v305 = vmul.f32 %v249, %v297
    %v306 = vmul.f32 %v251, %v298
    %v307 = vmul.f32 %v253, %v298
    %v308 = vmul.f32 %v255, %v298
    %v309 = vmul.f32 %v257, %v298
    %v310 = vmul.f32 %v259, %v299
    %v311 = vmul.f32 %v261, %v299
    %v312 = vmul.f32 %v263, %v299
    %v313 = vmul.f32 %v265, %v299
    %v314 = vmul.f32 %v267, %v300
    %v315 = vmul.f32 %v269, %v300
    %v316 = vmul.f32 %v271, %v300
    %v317 = vmul.f32 %v273, %v300
    %v318 = vmul.f32 %v275, %v301
    %v319 = vmul.f32 %v277, %v301
    %v320 = vmul.f32 %v279, %v301
    %v321 = vmul.f32 %v281, %v301
    %v322 = vld [vmem:[#allocation5] sm:$0xff]
    %v323 = vld [vmem:[#allocation5 + $0x8] sm:$0xff]
    %v324 = vld [vmem:[#allocation5 + $0x10] sm:$0xff]
    %v325 = vld [vmem:[#allocation5 + $0x18] sm:$0xff]
    %v326 = vld [vmem:[#allocation5 + $0x20] sm:$0xff]
    %v327 = vld [vmem:[#allocation7] sm:$0xff]
    %v328 = vld [vmem:[#allocation7 + $0x8] sm:$0xff]
    %v329 = vld [vmem:[#allocation7 + $0x10] sm:$0xff]
    %v330 = vld [vmem:[#allocation7 + $0x18] sm:$0xff]
    %v331 = vld [vmem:[#allocation7 + $0x20] sm:$0xff]
    %v332 = vld [vmem:[#allocation7 + $0x28] sm:$0xff]
    %v333 = vld [vmem:[#allocation7 + $0x30] sm:$0xff]
    %v334 = vld [vmem:[#allocation7 + $0x38] sm:$0xff]
    %v335 = vld [vmem:[#allocation7 + $0x40] sm:$0xff]
    %v336 = vld [vmem:[#allocation7 + $0x48] sm:$0xff]
    %v337 = vld [vmem:[#allocation7 + $0x50] sm:$0xff]
    %v338 = vld [vmem:[#allocation7 + $0x58] sm:$0xff]
    %v339 = vld [vmem:[#allocation7 + $0x60] sm:$0xff]
    %v340 = vld [vmem:[#allocation7 + $0x68] sm:$0xff]
    %v341 = vld [vmem:[#allocation7 + $0x70] sm:$0xff]
    %v342 = vld [vmem:[#allocation7 + $0x78] sm:$0xff]
    %v343 = vld [vmem:[#allocation7 + $0x80] sm:$0xff]
    %v344 = vld [vmem:[#allocation7 + $0x88] sm:$0xff]
    %v345 = vld [vmem:[#allocation7 + $0x90] sm:$0xff]
    %v346 = vld [vmem:[#allocation7 + $0x98] sm:$0xff]
    %v347 = vmul.f32 %v302, %v327
    %v348 = vmul.f32 %v303, %v328
    %v349 = vmul.f32 %v304, %v329
    %v350 = vmul.f32 %v305, %v330
    %v351 = vmul.f32 %v306, %v331
    %v352 = vmul.f32 %v307, %v332
    %v353 = vmul.f32 %v308, %v333
    %v354 = vmul.f32 %v309, %v334
    %v355 = vmul.f32 %v310, %v335
    %v356 = vmul.f32 %v311, %v336
    %v357 = vmul.f32 %v312, %v337
    %v358 = vmul.f32 %v313, %v338
    %v359 = vmul.f32 %v314, %v339
    %v360 = vmul.f32 %v315, %v340
    %v361 = vmul.f32 %v316, %v341
    %v362 = vmul.f32 %v317, %v342
    %v363 = vmul.f32 %v318, %v343
    %v364 = vmul.f32 %v319, %v344
    %v365 = vmul.f32 %v320, %v345
    %v366 = vmul.f32 %v321, %v346
    %v367 = vsel %vm146, %v347, 0.0
    %v368 = vsel %vm146, %v348, 0.0
    %v369 = vadd.f32 %v367, %v368
    %v370 = vsel %vm146, %v349, 0.0
    %v371 = vadd.f32 %v369, %v370
    %v372 = vsel %vm146, %v350, 0.0
    %v373 = vadd.f32 %v371, %v372
    %v374 = vsel %vm146, %v351, 0.0
    %v375 = vsel %vm146, %v352, 0.0
    %v376 = vadd.f32 %v374, %v375
    %v377 = vsel %vm146, %v353, 0.0
    %v378 = vadd.f32 %v376, %v377
    %v379 = vsel %vm146, %v354, 0.0
    %v380 = vadd.f32 %v378, %v379
    %v381 = vsel %vm146, %v355, 0.0
    %v382 = vsel %vm146, %v356, 0.0
    %v383 = vadd.f32 %v381, %v382
    %v384 = vsel %vm146, %v357, 0.0
    %v385 = vadd.f32 %v383, %v384
    %v386 = vsel %vm146, %v358, 0.0
    %v387 = vadd.f32 %v385, %v386
    %v388 = vsel %vm146, %v359, 0.0
    %v389 = vsel %vm146, %v360, 0.0
    %v390 = vadd.f32 %v388, %v389
    %v391 = vsel %vm146, %v361, 0.0
    %v392 = vadd.f32 %v390, %v391
    %v393 = vsel %vm146, %v362, 0.0
    %v394 = vadd.f32 %v392, %v393
    %v395 = vsel %vm146, %v363, 0.0
    %v396 = vsel %vm146, %v364, 0.0
    %v397 = vadd.f32 %v395, %v396
    %v398 = vsel %vm146, %v365, 0.0
    %v399 = vadd.f32 %v397, %v398
    %v400 = vsel %vm146, %v366, 0.0
    %v401 = vadd.f32 %v399, %v400
    %v402 = vadd.f32 %v322, %v373
    %v403 = vadd.f32 %v323, %v380
    %v404 = vadd.f32 %v324, %v387
    %v405 = vadd.f32 %v325, %v394
    %v406 = vadd.f32 %v326, %v401
    %v408 = vperm.slane %v105, 0
    %v411 = vsel %vm146, %v402, 0
    %v414 = vsel %vm146, %v403, 0
    %v417 = vsel %vm146, %v404, 0
    %v420 = vsel %vm146, %v405, 0
    %v423 = vsel %vm146, %v406, 0
    %425 = vmatpush.msra.mxu0 0.0
    %426 = vmatpush.msra.mxu0 0.0
    %427 = vmatpush.msra.mxu0 0.0
    %428 = vmatpush.msra.mxu0 0.0
    %429 = vmatpush.msra.mxu0 0.0
    %430 = vmatpush.msra.mxu0 0.0
    %431 = vmatpush.msra.mxu0 0.0
    %432 = vmatpush.msra.mxu0 0.0
    %433 = vmatpush.msra.mxu0 0.0
    %434 = vmatpush.msra.mxu0 0.0
    %435 = vmatpush.msra.mxu0 0.0
    %436 = vmatpush.msra.mxu0 0.0
    %437 = vmatpush.msra.mxu0 %v104
    %438 = vmatpush.msra.mxu0 %v103
    %439 = vmatpush.msra.mxu0 %v102
    %440 = vmatpush.msra.mxu0 %v101
    %441 = vmatmul.f32.gmra.mxu0 %v411
    %v442 = vpop.f32.mrf.mxu0
    %v443 = vadd.f32 %v408, %v442
    %444 = vmatmul.f32.gmra.mxu0 %v414
    %v445 = vpop.f32.mrf.mxu0
    %v446 = vadd.f32 %v408, %v445
    %447 = vmatmul.f32.gmra.mxu0 %v417
    %v448 = vpop.f32.mrf.mxu0
    %v449 = vadd.f32 %v408, %v448
    %450 = vmatmul.f32.gmra.mxu0 %v420
    %v451 = vpop.f32.mrf.mxu0
    %v452 = vadd.f32 %v408, %v451
    %453 = vmatmul.f32.gmra.mxu0 %v423
    %v454 = vpop.f32.mrf.mxu0
    %v455 = vadd.f32 %v408, %v454
    %456 = vdwg.mxu0
    %v457 = vxor.u32 %v443, 2147483648
    %v458 = vxor.u32 %v446, 2147483648
    %v459 = vxor.u32 %v449, 2147483648
    %v460 = vxor.u32 %v452, 2147483648
    %v461 = vxor.u32 %v455, 2147483648
    %v462 = vmul.f32 %v457, 1.442695
    %v463 = vpow.pop %v462
    %v464 = vmul.f32 %v458, 1.442695
    %v465 = vpow.pop %v464
    %v466 = vmul.f32 %v459, 1.442695
    %v467 = vpow.pop %v466
    %v468 = vmul.f32 %v460, 1.442695
    %v469 = vpow.pop %v468
    %v470 = vmul.f32 %v461, 1.442695
    %v471 = vpow.pop %v470
    %v472 = vadd.f32 %v463, 1.0
    %v473 = vadd.f32 %v465, 1.0
    %v474 = vadd.f32 %v467, 1.0
    %v475 = vadd.f32 %v469, 1.0
    %v476 = vadd.f32 %v471, 1.0
    %v477 = vrcp.pop %v472
    %v478 = vmul.f32 %v472, %v477
    %v479 = vsub.f32 1.0, %v478
    %v480 = vmul.f32 %v477, %v479
    %v481 = vadd.f32 %v477, %v480
    %vm482 = vweird.f32 %v472
    %vm483 = vweird.f32 %v477
    %vm484 = vmor %vm482, %vm483
    %v485 = vsel %vm484, %v477, %v481
    %v486 = vand.u32 2147483647, %v472
    %vm487 = vcmp.eq.f32.partialorder %v486, 8.507059e+37
    %v488 = vand.u32 %v472, 2147483648
    %v489 = vor.u32 1.1754944e-38, %v488
    %v490 = vsel %vm487, %v489, %v485
    %v491 = vmul.f32 1.0, %v490
    %v492 = vrcp.pop %v473
    %v493 = vmul.f32 %v473, %v492
    %v494 = vsub.f32 1.0, %v493
    %v495 = vmul.f32 %v492, %v494
    %v496 = vadd.f32 %v492, %v495
    %vm497 = vweird.f32 %v473
    %vm498 = vweird.f32 %v492
    %vm499 = vmor %vm497, %vm498
    %v500 = vsel %vm499, %v492, %v496
    %v501 = vand.u32 2147483647, %v473
    %vm502 = vcmp.eq.f32.partialorder %v501, 8.507059e+37
    %v503 = vand.u32 %v473, 2147483648
    %v504 = vor.u32 1.1754944e-38, %v503
    %v505 = vsel %vm502, %v504, %v500
    %v506 = vmul.f32 1.0, %v505
    %v507 = vrcp.pop %v474
    %v508 = vmul.f32 %v474, %v507
    %v509 = vsub.f32 1.0, %v508
    %v510 = vmul.f32 %v507, %v509
    %v511 = vadd.f32 %v507, %v510
    %vm512 = vweird.f32 %v474
    %vm513 = vweird.f32 %v507
    %vm514 = vmor %vm512, %vm513
    %v515 = vsel %vm514, %v507, %v511
    %v516 = vand.u32 2147483647, %v474
    %vm517 = vcmp.eq.f32.partialorder %v516, 8.507059e+37
    %v518 = vand.u32 %v474, 2147483648
    %v519 = vor.u32 1.1754944e-38, %v518
    %v520 = vsel %vm517, %v519, %v515
    %v521 = vmul.f32 1.0, %v520
    %v522 = vrcp.pop %v475
    %v523 = vmul.f32 %v475, %v522
    %v524 = vsub.f32 1.0, %v523
    %v525 = vmul.f32 %v522, %v524
    %v526 = vadd.f32 %v522, %v525
    %vm527 = vweird.f32 %v475
    %vm528 = vweird.f32 %v522
    %vm529 = vmor %vm527, %vm528
    %v530 = vsel %vm529, %v522, %v526
    %v531 = vand.u32 2147483647, %v475
    %vm532 = vcmp.eq.f32.partialorder %v531, 8.507059e+37
    %v533 = vand.u32 %v475, 2147483648
    %v534 = vor.u32 1.1754944e-38, %v533
    %v535 = vsel %vm532, %v534, %v530
    %v536 = vmul.f32 1.0, %v535
    %v537 = vrcp.pop %v476
    %v538 = vmul.f32 %v476, %v537
    %v539 = vsub.f32 1.0, %v538
    %v540 = vmul.f32 %v537, %v539
    %v541 = vadd.f32 %v537, %v540
    %vm542 = vweird.f32 %v476
    %vm543 = vweird.f32 %v537
    %vm544 = vmor %vm542, %vm543
    %v545 = vsel %vm544, %v537, %v541
    %v546 = vand.u32 2147483647, %v476
    %vm547 = vcmp.eq.f32.partialorder %v546, 8.507059e+37
    %v548 = vand.u32 %v476, 2147483648
    %v549 = vor.u32 1.1754944e-38, %v548
    %v550 = vsel %vm547, %v549, %v545
    %v551 = vmul.f32 1.0, %v550
    %v552 = vmul.f32 %v302, %v506
    %v553 = vmul.f32 %v303, %v521
    %v554 = vmul.f32 %v304, %v536
    %v555 = vmul.f32 %v305, %v551
    %v556 = vsel %vm146, %v552, 0.0
    %v557 = vsel %vm146, %v553, 0.0
    %v558 = vadd.f32 %v556, %v557
    %v559 = vsel %vm146, %v554, 0.0
    %v560 = vadd.f32 %v558, %v559
    %v561 = vsel %vm146, %v555, 0.0
    %v562 = vadd.f32 %v560, %v561
    %v563 = vadd.f32 %v491, %v562
    %v565 = vsel %vm146, %v563, 0
    %567 = vmatpush.msra.mxu0 0.0
    %568 = vmatpush.msra.mxu0 0.0
    %569 = vmatpush.msra.mxu0 0.0
    %570 = vmatpush.msra.mxu0 0.0
    %571 = vmatpush.msra.mxu0 0.0
    %572 = vmatpush.msra.mxu0 0.0
    %573 = vmatpush.msra.mxu0 0.0
    %574 = vmatpush.msra.mxu0 0.0
    %575 = vmatpush.msra.mxu0 0.0
    %576 = vmatpush.msra.mxu0 0.0
    %577 = vmatpush.msra.mxu0 0.0
    %578 = vmatpush.msra.mxu0 0.0
    %579 = vmatpush.msra.mxu0 %v104
    %580 = vmatpush.msra.mxu0 %v103
    %581 = vmatpush.msra.mxu0 %v102
    %582 = vmatpush.msra.mxu0 %v101
    %583 = vmatmul.f32.gmra.mxu0 %v565
    %v584 = vpop.f32.mrf.mxu0
    %v585 = vadd.f32 %v408, %v584
    %586 = vdwg.mxu0
    %v587 = vtanh.pop %v585
    %v588 = vmul.f32 %v100, %v587
    %v589 = vsel %vm146, %v588, 0.0
    %590 = vadd.xlane.f32.xlu0 %v589
    %v591 = vpop.xlane.xlu0 %590
    %v592 = vxor.u32 %v591, 2147483648
    %v593 = vmul.f32 %v592, 1.442695
    %v594 = vpow.pop %v593
    %v595 = vadd.f32 %v594, 1.0
    %v596 = vrcp.pop %v595
    %v597 = vmul.f32 %v595, %v596
    %v598 = vsub.f32 1.0, %v597
    %v599 = vmul.f32 %v596, %v598
    %v600 = vadd.f32 %v596, %v599
    %vm601 = vweird.f32 %v595
    %vm602 = vweird.f32 %v596
    %vm603 = vmor %vm601, %vm602
    %v604 = vsel %vm603, %v596, %v600
    %v605 = vand.u32 2147483647, %v595
    %vm606 = vcmp.eq.f32.partialorder %v605, 8.507059e+37
    %v607 = vand.u32 %v595, 2147483648
    %v608 = vor.u32 1.1754944e-38, %v607
    %v609 = vsel %vm606, %v608, %v604
    %v610 = vmul.f32 1.0, %v609
    %v612 = vlaneseq
    %v613 = vand.u32 %v612, 127
    %v614 = vperm.slane %v610, %v613
    %vm616 = vcmask 57344
    %617 = vst.msk [vmem:[#allocation11] sm:$0x1] %vm616, %v614
    // Predicated region
    $region46: #{tpu_custom_call.1} parent=1 // pred_check
      _
    $region47: #{tpu_custom_call.1} parent=1 // pred_check_branch
      %619 = sbr.rel (0) target = $region49
    $region48: #{tpu_custom_call.1} parent=1 // pred_region
      %621 = vsyncadd [#allocation4], 0
      %s623 = sshll.u32 [#allocation11], 4
      %s624 = int_to_ptr.vmem [resolvable:$true] %s623
      %s625 = sshll.u32 %s6, 4
      %s626 = int_to_ptr.hbm [resolvable:$true] %s625
      %628 = dma.vmem_to_hbm [thread:$0]  %s624, 16, %s626, [#allocation4]
    $region49: #{tpu_custom_call.1} parent=1 // pred_fallthru
      _
    // Predicated region
    $region50: #{tpu_custom_call.1} parent=1 // pred_check
      _
    $region51: #{tpu_custom_call.1} parent=1 // pred_check_branch
      %630 = sbr.rel (0) target = $region53
    $region52: #{tpu_custom_call.1} parent=1 // pred_region
      %632 = dma.done [#allocation4], 16
    $region53: #{tpu_custom_call.1} parent=1 // pred_fallthru
      _
    %633 = vsyncpa [#allocation3], 1
    %634 = vsyncpa [#allocation6], 1
    %635 = vsyncpa [#allocation9], 1
    %636 = vsyncpa [#allocation4], 1

</llo_original>
